<compile_context>
chip_gen: v6e
topology: v6e:2x2x1
jax: 0.10.0
libtpu: 0.0.40
codegen_flags: <defaults>
</compile_context>

<pallas_src>
import jax
import jax.numpy as jnp
from jax.experimental import pallas as pl
from jax.experimental.pallas import tpu as pltpu


def _round_up(x, m):
    return (x + m - 1) // m * m


# ---------------------------------------------------------------------------
# Kernels
# ---------------------------------------------------------------------------
def _nt_mu_kernel_f32out(x_ref, w_ref, o_ref):
    # x_ref: (tm, tk)   w_ref: (tk, tn)   o_ref: (tm, tn) f32 (resident over K)
    k = pl.program_id(2)
    prod = jnp.dot(x_ref[...], w_ref[...], preferred_element_type=jnp.float32)

    @pl.when(k == 0)
    def _():
        o_ref[...] = prod            # first K step: write (no zero-fill + add)

    @pl.when(k > 0)
    def _():
        o_ref[...] += prod


def _nt_mu_kernel_scratch(x_ref, w_ref, o_ref, acc_ref):
    # Low-precision outputs: accumulate in an f32 VMEM scratch, cast at the end.
    k = pl.program_id(2)
    prod = jnp.dot(x_ref[...], w_ref[...], preferred_element_type=jnp.float32)

    @pl.when(k == 0)
    def _():
        acc_ref[...] = prod

    @pl.when(k > 0)
    def _():
        acc_ref[...] += prod

    @pl.when(k == pl.num_programs(2) - 1)
    def _():
        o_ref[...] = acc_ref[...].astype(o_ref.dtype)


# ---------------------------------------------------------------------------
# Tile planning
# ---------------------------------------------------------------------------
def _vmem_budget_bytes():
    """Usable scoped-VMEM budget for this generation (~20% Mosaic headroom)."""
    cap = 64 * 1024 * 1024                       # conservative default (v7x)
    try:
        cap = int(pltpu.get_tpu_info().vmem_capacity_bytes)
    except Exception:
        pass
    # v5e/v6e: 128 MiB -> ~102 MiB budget; v7x: 64 MiB -> ~51 MiB budget.
    return int(cap * 0.8)


def _sublane_align(itemsize):
    return {4: 8, 2: 16, 1: 32}.get(itemsize, 8)


def _plan_tiles(m, k, n, in_itemsize, out_itemsize, out_is_f32,
                tm, tn, tk, vmem_budget, weight_resident):
    m_align = _sublane_align(in_itemsize)

    # Re-align caller tiles to the (sublane, 128) constraint and never exceed
    # the (aligned) problem size.
    tm_eff = min(_round_up(max(tm, m_align), m_align), _round_up(m, m_align))
    tn_eff = min(_round_up(max(tn, 128), 128), _round_up(n, 128))
    tk_eff = min(_round_up(max(tk, 128), 128), _round_up(k, 128))

    # Weight-resident fast path: whole (K, N) weight lives in VMEM, its block
    # index is constant over the grid -> one DMA, K grid axis collapses to 1.
    kp_full = _round_up(k, 128)
    np_full = _round_up(n, 128)
    w_resident = False
    if weight_resident and 2 * kp_full * np_full * in_itemsize <= vmem_budget // 2:
        tk_eff, tn_eff = kp_full, np_full
        w_resident = True

    def footprint(tm_e, tn_e, tk_e):
        fp = 2 * tm_e * tk_e * in_itemsize       # double-buffered x tiles
        fp += 2 * tk_e * tn_e * in_itemsize      # (double-buffered) weight tiles
        fp += 2 * tm_e * tn_e * out_itemsize     # output tiles (resident over K)
        if not out_is_f32:
            fp += tm_e * tn_e * 4                # f32 scratch accumulator
        return fp

    # Gracefully shrink tiles until they fit the per-generation budget.
    while footprint(tm_eff, tn_eff, tk_eff) > vmem_budget:
        if tm_eff > max(64, m_align):
            tm_eff = _round_up(tm_eff // 2, m_align)
        elif (not w_resident) and tk_eff > 128:
            tk_eff = _round_up(tk_eff // 2, 128)
        elif tn_eff > 128:
            tn_eff = _round_up(tn_eff // 2, 128)
            w_resident = False
        elif tk_eff > 128:
            tk_eff = _round_up(tk_eff // 2, 128)
            w_resident = False
        elif tm_eff > m_align:
            tm_eff = _round_up(tm_eff // 2, m_align)
        else:
            break

    return tm_eff, tn_eff, tk_eff, footprint(tm_eff, tn_eff, tk_eff)


# ---------------------------------------------------------------------------
# Pallas matmul wrapper
# ---------------------------------------------------------------------------
def _nt_mu_pallas_2d(x2d, w_t, *, out_dtype, tm, tn, tk, weight_resident=True):
    """x2d: (M, K) @ w_t: (K, N) -> (M, N). Tiled, pipelined MXU matmul."""
    m, k = x2d.shape
    k2, n = w_t.shape
    assert k == k2

    in_itemsize = jnp.dtype(x2d.dtype).itemsize
    out_itemsize = jnp.dtype(out_dtype).itemsize
    out_is_f32 = jnp.dtype(out_dtype) == jnp.dtype(jnp.float32)

    vmem_budget = _vmem_budget_bytes()
    tm_eff, tn_eff, tk_eff, fp = _plan_tiles(
        m, k, n, in_itemsize, out_itemsize, out_is_f32,
        tm, tn, tk, vmem_budget, weight_resident)

    # K is zero-padded exactly on BOTH operands (adds 0 to the reduction, and
    # is a no-op whenever K is already 128-aligned). The M and output-N ragged
    # edges are handled by cdiv grids + masked partial tiles -- no padded copy
    # of the activation is ever materialized.
    kp = _round_up(k, tk_eff)
    if kp != k:
        x2d = jnp.pad(x2d, ((0, 0), (0, kp - k)))
        w_t = jnp.pad(w_t, ((0, kp - k), (0, 0)))

    grid_m = pl.cdiv(m, tm_eff)
    grid_n = pl.cdiv(n, tn_eff)
    grid_k = kp // tk_eff

    # v7x megacore: make sure the "parallel" part of the grid has >= 2 tiles so
    # both TensorCores get work (a harmless extra grid step on v5e/v6e).
    flops = 2 * m * k * n
    if grid_m * grid_n == 1 and flops >= int(4e7):
        m_align = _sublane_align(in_itemsize)
        if tm_eff >= 2 * m_align:
            tm_eff = _round_up(tm_eff // 2, m_align)
        elif tn_eff >= 256:
            tn_eff //= 2
        grid_m = pl.cdiv(m, tm_eff)
        grid_n = pl.cdiv(n, tn_eff)

    # Advisory cost: x is re-streamed grid_n times (unless K collapses), the
    # weight grid_m times (unless it is fully VMEM-resident).
    x_reads = 1 if grid_k == 1 else grid_n
    w_reads = 1 if (grid_k == 1 and grid_n == 1) else grid_m
    cost = pl.CostEstimate(
        flops=flops,
        transcendentals=0,
        bytes_accessed=(m * kp * in_itemsize * x_reads
                        + kp * n * in_itemsize * w_reads
                        + m * n * out_itemsize),
    )

    vmem_limit = int(min(vmem_budget, max(32 * 1024 * 1024, int(fp * 1.5))))

    if out_is_f32:
        kernel = _nt_mu_kernel_f32out
        scratch = ()
    else:
        kernel = _nt_mu_kernel_scratch
        scratch = (pltpu.VMEM((tm_eff, tn_eff), jnp.float32),)

    return pl.pallas_call(
        kernel,
        out_shape=jax.ShapeDtypeStruct((m, n), out_dtype),
        grid_spec=pltpu.PrefetchScalarGridSpec(
            num_scalar_prefetch=0,
            grid=(grid_m, grid_n, grid_k),
            in_specs=[
                pl.BlockSpec((tm_eff, tk_eff), lambda i, j, kk: (i, kk)),
                pl.BlockSpec((tk_eff, tn_eff), lambda i, j, kk: (kk, j)),
            ],
            out_specs=pl.BlockSpec((tm_eff, tn_eff), lambda i, j, kk: (i, j)),
            scratch_shapes=scratch,
        ),
        compiler_params=pltpu.CompilerParams(
            dimension_semantics=("parallel", "parallel", "arbitrary"),
            vmem_limit_bytes=vmem_limit,
        ),
        cost_estimate=cost,
    )(x2d, w_t)


# ---------------------------------------------------------------------------
# Module-level forward
# ---------------------------------------------------------------------------
def nt_mu_prepare_weight(weight):
    """Pre-transpose the (outdim, indim) buffer ONCE at parameter-load time to
    the MXU-friendly (indim, outdim) layout (hoists the per-call W.T pass)."""
    return jnp.asarray(weight).T


def nt_mu_forward(x, weight=None, *, weight_t=None, tm=512, tn=1024, tk=1024,
                  compute_dtype=None, weight_resident=True, force_pallas=False):
    """y = F.linear(x, weight) = x @ weight.T (no bias).

    Supply either `weight` ((outdim, indim); transposed internally) or the
    pre-transposed `weight_t` ((indim, outdim)) from nt_mu_prepare_weight.
    `compute_dtype` (e.g. jnp.bfloat16) optionally casts MXU operands while
    keeping f32 accumulation and the original output dtype.
    """
    if weight_t is None:
        assert weight is not None, "need weight or weight_t"
        weight_t = weight.T
    indim, outdim = weight_t.shape
    *lead, x_indim = x.shape
    assert x_indim == indim, "indim mismatch"

    m = 1
    for d in lead:
        m *= d
    out_dtype = x.dtype
    x2d = x.reshape(m, indim)

    if compute_dtype is not None:
        x2d = x2d.astype(compute_dtype)
        weight_t = weight_t.astype(compute_dtype)

    # Tiny problems: pallas_call launch + DMA setup dwarfs the MACs; let XLA's
    # fused matmul handle it unless the caller forces the kernel path.
    if not force_pallas and 2 * m * indim * outdim < int(1e7):
        y2d = (x2d @ weight_t).astype(out_dtype)
    else:
        y2d = _nt_mu_pallas_2d(x2d, weight_t, out_dtype=out_dtype,
                               tm=tm, tn=tn, tk=tk,
                               weight_resident=weight_resident)

    return y2d.reshape(*lead, outdim)


if __name__ == "__main__":
    key = jax.random.PRNGKey(0)
    kx, kw, kx2, kw2 = jax.random.split(key, 4)

    # Small shapes consistent with the module: x = (batch, seq, indim).
    batch, seq, indim, outdim = 2, 8, 32, 16
    x = jax.random.normal(kx, (batch, seq, indim), dtype=jnp.float32)

    # Faithful to nn.init.constant_(self.weight, 0): the buffer is all zeros.
    weight = jnp.zeros((outdim, indim), dtype=jnp.float32)
    y = nt_mu_forward(x, weight, force_pallas=True)
    jax.block_until_ready(y)
    assert y.shape == (batch, seq, outdim)
    assert jnp.allclose(y, x @ weight.T, atol=1e-5), "mismatch (zero weight)"

    # Non-zero weight: weight-resident fast path (grid collapses over K/N).
    w_nz = 0.05 * jax.random.normal(kw, (outdim, indim), dtype=jnp.float32)
    y_nz = nt_mu_forward(x, w_nz, force_pallas=True)
    jax.block_until_ready(y_nz)
    assert jnp.allclose(y_nz, x @ w_nz.T, atol=1e-4, rtol=1e-4), "mismatch (pallas)"

    # Pre-transposed weight path must agree.
    w_t = nt_mu_prepare_weight(w_nz)
    y_t = nt_mu_forward(x, weight_t=w_t, force_pallas=True)
    jax.block_until_ready(y_t)
    assert jnp.allclose(y_t, y_nz, atol=1e-6), "mismatch (pre-transposed weight)"

    # Ragged M / ragged N / padded-K multi-step accumulation path: small tiles,
    # weight residency disabled so grid_k > 1 and masked edge tiles are hit.
    b2, s2, ind2, out2 = 3, 70, 200, 130
    x2 = jax.random.normal(kx2, (b2, s2, ind2), dtype=jnp.float32)
    w2 = 0.05 * jax.random.normal(kw2, (out2, ind2), dtype=jnp.float32)
    y2 = nt_mu_forward(x2, w2, tm=16, tn=128, tk=128,
                       weight_resident=False, force_pallas=True)
    jax.block_until_ready(y2)
    assert y2.shape == (b2, s2, out2)
    assert jnp.allclose(y2, x2 @ w2.T, atol=1e-4, rtol=1e-4), "mismatch (ragged)"

    # Default dispatch (tiny problem -> plain XLA matmul) must agree too.
    y_xla = nt_mu_forward(x, w_nz)
    jax.block_until_ready(y_xla)
    assert jnp.allclose(y_xla, x @ w_nz.T, atol=1e-4, rtol=1e-4), "mismatch (xla path)"

    print("KERNEL_OK")
</pallas_src>

<mosaic_0001>
module attributes {stable_mosaic.version = 11 : i64} {
  func.func @_nt_mu_kernel_f32out(%arg0: i32, %arg1: i32, %arg2: i32, %arg3: memref<16x128xf32, #tpu.memory_space<vmem>>, %arg4: memref<128x128xf32, #tpu.memory_space<vmem>>, %arg5: memref<16x128xf32, #tpu.memory_space<vmem>>) attributes {dimension_semantics = [#tpu.dimension_semantics<parallel>, #tpu.dimension_semantics<parallel>, #tpu.dimension_semantics<arbitrary>], iteration_bounds = array<i64: 1, 1, 1>, scalar_prefetch = 0 : i64, scratch_operands = 0 : i64, tpu.core_type = #tpu.core_type<tc>, window_params = [{transform_indices = @transform_0, window_bounds = array<i64: 16, 128>}, {transform_indices = @transform_1, window_bounds = array<i64: 128, 128>}, {transform_indices = @transform_2, window_bounds = array<i64: 16, 128>}]} {
    %c0 = arith.constant 0 : index
    %c0_0 = arith.constant 0 : index
    %0 = vector.load %arg3[%c0, %c0_0] : memref<16x128xf32, #tpu.memory_space<vmem>>, vector<16x128xf32>
    %c0_1 = arith.constant 0 : index
    %c0_2 = arith.constant 0 : index
    %1 = vector.load %arg4[%c0_1, %c0_2] : memref<128x128xf32, #tpu.memory_space<vmem>>, vector<128x128xf32>
    %cst = arith.constant dense<0.000000e+00> : vector<16x128xf32>
    %2 = tpu.matmul %0, %1, %cst {dimension_numbers = #tpu.dot_dimension_numbers<[1], [0], [0], [1], [0, 0, 1, 1], [], []>} : vector<16x128xf32>, vector<128x128xf32>, vector<16x128xf32> -> vector<16x128xf32>
    %c0_i32 = arith.constant 0 : i32
    %3 = arith.cmpi eq, %arg2, %c0_i32 : i32
    %4 = arith.extui %3 : i1 to i32
    %c0_i32_3 = arith.constant 0 : i32
    %5 = arith.cmpi ne, %4, %c0_i32_3 : i32
    scf.if %5 {
      %c0_6 = arith.constant 0 : index
      %c0_7 = arith.constant 0 : index
      %9 = vector.load %arg5[%c0_6, %c0_7] : memref<16x128xf32, #tpu.memory_space<vmem>>, vector<16x128xf32>
      tpu.vector_store %arg5[%c0_6, %c0_7], %2 {strides = array<i32>} : memref<16x128xf32, #tpu.memory_space<vmem>>, vector<16x128xf32>,
    } else {
    }
    %c0_i32_4 = arith.constant 0 : i32
    %6 = arith.cmpi sgt, %arg2, %c0_i32_4 : i32
    %7 = arith.extui %6 : i1 to i32
    %c0_i32_5 = arith.constant 0 : i32
    %8 = arith.cmpi ne, %7, %c0_i32_5 : i32
    scf.if %8 {
      %c0_6 = arith.constant 0 : index
      %c0_7 = arith.constant 0 : index
      %9 = vector.load %arg5[%c0_6, %c0_7] : memref<16x128xf32, #tpu.memory_space<vmem>>, vector<16x128xf32>
      %10 = arith.addf %9, %2 : vector<16x128xf32>
      %c0_8 = arith.constant 0 : index
      %c0_9 = arith.constant 0 : index
      %11 = vector.load %arg5[%c0_8, %c0_9] : memref<16x128xf32, #tpu.memory_space<vmem>>, vector<16x128xf32>
      tpu.vector_store %arg5[%c0_8, %c0_9], %10 {strides = array<i32>} : memref<16x128xf32, #tpu.memory_space<vmem>>, vector<16x128xf32>,
    } else {
    }
    return
  }
  func.func @transform_0(%arg0: i32, %arg1: i32, %arg2: i32) -> (i32, i32) {
    %c0_i32 = arith.constant 0 : i32
    return %arg0, %arg2 : i32, i32
  }
  func.func @transform_1(%arg0: i32, %arg1: i32, %arg2: i32) -> (i32, i32) {
    %c0_i32 = arith.constant 0 : i32
    return %arg2, %arg1 : i32, i32
  }
  func.func @transform_2(%arg0: i32, %arg1: i32, %arg2: i32) -> (i32, i32) {
    %c0_i32 = arith.constant 0 : i32
    return %arg0, %arg1 : i32, i32
  }
}

</mosaic_0001>

<llo_original>
// kernel: tpu_custom_call.1
$region0: #{tpu_custom_call.1}
  #allocation0 [shape = 'u32[]', space=smem, size = 0x4, offset = 0x4, fixed_abs, tag = 'smem constant byte address 0x4 - core index']
  #allocation1 [shape = 'u32[144,128]{1,0:T(1,128)}', space=vmem, size = 0x12000, scoped, tag = 'internal scratch']
  %s0 = inlined_call_operand.vmem [shape: f32[16,128], index: 0, kind: input, shape index: {}]
  %s1 = inlined_call_operand.vmem [shape: f32[128,16], index: 1, kind: input, shape index: {}]
  %s2 = inlined_call_operand.hbm [shape: f32[16,16], index: 2, kind: output, shape index: {}]
  %s3 = sld [smem:[#allocation0]]
  $region26: #{tpu_custom_call.1} parent=0
    _
  %s5 = ssub.s32 1, %s3
  %s6 = scalar_select 0, %s5, %s3
  $region1: #{tpu_custom_call.1} parent=0
    #allocation2 [shape = 'u8[8192]{0}', space=vmem, size = 0x2000, scoped, tag = 'output window, operand 0, single buffered']
    #allocation3 [shape = 's32[1]{0}', space=sflag, size = 0x4, scoped, tag = 'scoped memory for tpu_custom_call.1']
    %7 = vsyncpa [#allocation3], 0
    // Predicated region
    $region2: #{tpu_custom_call.1} parent=1 // pred_check
      _
    $region3: #{tpu_custom_call.1} parent=1 // pred_check_branch
      %9 = sbr.rel (0) target = $region5
    $region4: #{tpu_custom_call.1} parent=1 // pred_region
      _
    $region5: #{tpu_custom_call.1} parent=1 // pred_fallthru
      _
    // Predicated region
    $region6: #{tpu_custom_call.1} parent=1 // pred_check
      _
    $region7: #{tpu_custom_call.1} parent=1 // pred_check_branch
      %11 = sbr.rel (0) target = $region9
    $region8: #{tpu_custom_call.1} parent=1 // pred_region
      _
    $region9: #{tpu_custom_call.1} parent=1 // pred_fallthru
      _
    %v12 = vld [vmem:[%s0] sm:$0xff]
    %v13 = vld [vmem:[%s0 + $0x8] sm:$0xff]
    %v14 = vld [vmem:[%s1] sm:$0xff]
    %v15 = vld [vmem:[%s1 + $0x8] sm:$0xff]
    %v16 = vld [vmem:[%s1 + $0x10] sm:$0xff]
    %v17 = vld [vmem:[%s1 + $0x18] sm:$0xff]
    %v18 = vld [vmem:[%s1 + $0x20] sm:$0xff]
    %v19 = vld [vmem:[%s1 + $0x28] sm:$0xff]
    %v20 = vld [vmem:[%s1 + $0x30] sm:$0xff]
    %v21 = vld [vmem:[%s1 + $0x38] sm:$0xff]
    %v22 = vld [vmem:[%s1 + $0x40] sm:$0xff]
    %v23 = vld [vmem:[%s1 + $0x48] sm:$0xff]
    %v24 = vld [vmem:[%s1 + $0x50] sm:$0xff]
    %v25 = vld [vmem:[%s1 + $0x58] sm:$0xff]
    %v26 = vld [vmem:[%s1 + $0x60] sm:$0xff]
    %v27 = vld [vmem:[%s1 + $0x68] sm:$0xff]
    %v28 = vld [vmem:[%s1 + $0x70] sm:$0xff]
    %v29 = vld [vmem:[%s1 + $0x78] sm:$0xff]
    %30 = vmatprep.subr.mxu0 0.0
    %31 = vmatpush1.msra.mxu0 %v29
    %32 = vmatprep.subr.mxu0 0.0
    %33 = vmatpush1.msra.mxu0 %v28
    %34 = vmatprep.subr.mxu0 0.0
    %35 = vmatpush1.msra.mxu0 %v27
    %36 = vmatprep.subr.mxu0 0.0
    %37 = vmatpush1.msra.mxu0 %v26
    %38 = vmatprep.subr.mxu0 0.0
    %39 = vmatpush1.msra.mxu0 %v25
    %40 = vmatprep.subr.mxu0 0.0
    %41 = vmatpush1.msra.mxu0 %v24
    %42 = vmatprep.subr.mxu0 0.0
    %43 = vmatpush1.msra.mxu0 %v23
    %44 = vmatprep.subr.mxu0 0.0
    %45 = vmatpush1.msra.mxu0 %v22
    %46 = vmatprep.subr.mxu0 0.0
    %47 = vmatpush1.msra.mxu0 %v21
    %48 = vmatprep.subr.mxu0 0.0
    %49 = vmatpush1.msra.mxu0 %v20
    %50 = vmatprep.subr.mxu0 0.0
    %51 = vmatpush1.msra.mxu0 %v19
    %52 = vmatprep.subr.mxu0 0.0
    %53 = vmatpush1.msra.mxu0 %v18
    %54 = vmatprep.subr.mxu0 0.0
    %55 = vmatpush1.msra.mxu0 %v17
    %56 = vmatprep.subr.mxu0 0.0
    %57 = vmatpush1.msra.mxu0 %v16
    %58 = vmatprep.subr.mxu0 0.0
    %59 = vmatpush1.msra.mxu0 %v15
    %60 = vmatprep.subr.mxu0 0.0
    %61 = vmatpush1.msra.mxu0 %v14
    %62 = vmatprep.subr.mxu0 0.0
    %63 = vmatpush2.msra.mxu0 0.0
    %64 = vmatprep.subr.mxu0 0.0
    %65 = vmatpush2.msra.mxu0 0.0
    %66 = vmatprep.subr.mxu0 0.0
    %67 = vmatpush2.msra.mxu0 0.0
    %68 = vmatprep.subr.mxu0 0.0
    %69 = vmatpush2.msra.mxu0 0.0
    %70 = vmatprep.subr.mxu0 0.0
    %71 = vmatpush2.msra.mxu0 0.0
    %72 = vmatprep.subr.mxu0 0.0
    %73 = vmatpush2.msra.mxu0 0.0
    %74 = vmatprep.subr.mxu0 0.0
    %75 = vmatpush2.msra.mxu0 0.0
    %76 = vmatprep.subr.mxu0 0.0
    %77 = vmatpush2.msra.mxu0 0.0
    %78 = vmatprep.subr.mxu0 0.0
    %79 = vmatpush2.msra.mxu0 0.0
    %80 = vmatprep.subr.mxu0 0.0
    %81 = vmatpush2.msra.mxu0 0.0
    %82 = vmatprep.subr.mxu0 0.0
    %83 = vmatpush2.msra.mxu0 0.0
    %84 = vmatprep.subr.mxu0 0.0
    %85 = vmatpush2.msra.mxu0 0.0
    %86 = vmatprep.subr.mxu0 0.0
    %87 = vmatpush2.msra.mxu0 0.0
    %88 = vmatprep.subr.mxu0 0.0
    %89 = vmatpush2.msra.mxu0 0.0
    %90 = vmatprep.subr.mxu0 0.0
    %91 = vmatpush2.msra.mxu0 0.0
    %92 = vmatprep.subr.mxu0 0.0
    %93 = vmatpush2.msra.mxu0 0.0
    %94 = vmatprep.mubr.f32.mxu0 0.0
    %95 = vmatmul.mubr.f32.gmra.mxu0 %v12
    %v96 = vpop.f32.mrf.mxu0
    %v97 = vadd.f32 0.0, %v96
    %v98 = vpop.f32.mrf.mxu0
    %99 = vmatprep.mubr.f32.mxu0 0.0
    %100 = vmatmul.mubr.f32.gmra.mxu0 %v13
    %v101 = vpop.f32.mrf.mxu0
    %v102 = vadd.f32 0.0, %v101
    %v103 = vpop.f32.mrf.mxu0
    %104 = vdwg.mxu0
    %p105 = scmp.eq.s32.totalorder 0, 0
    // Predicated region
    $region10: #{tpu_custom_call.1} parent=1 // pred_check
      %p106 = pneg %p105
    $region11: #{tpu_custom_call.1} parent=1 // pred_check_branch
      %108 = sbr.rel (%p106) target = $region13
    $region12: #{tpu_custom_call.1} parent=1 // pred_region
      %109 = vst [vmem:[#allocation2] sm:$0xff] %v97
      %110 = vst [vmem:[#allocation2 + $0x8] sm:$0xff] %v102
    $region13: #{tpu_custom_call.1} parent=1 // pred_fallthru
      _
    %p111 = scmp.gt.s32.totalorder 0, 0
    // Predicated region
    $region14: #{tpu_custom_call.1} parent=1 // pred_check
      %p112 = pneg %p111
    $region15: #{tpu_custom_call.1} parent=1 // pred_check_branch
      %114 = sbr.rel (%p112) target = $region17
    $region16: #{tpu_custom_call.1} parent=1 // pred_region
      %v115 = vld [vmem:[#allocation2] sm:$0xff]
      %v116 = vld [vmem:[#allocation2 + $0x8] sm:$0xff]
      %v117 = vadd.f32 %v115, %v97
      %v118 = vadd.f32 %v116, %v102
      %119 = vst [vmem:[#allocation2] sm:$0xff] %v117
      %120 = vst [vmem:[#allocation2 + $0x8] sm:$0xff] %v118
    $region17: #{tpu_custom_call.1} parent=1 // pred_fallthru
      _
    // Predicated region
    $region18: #{tpu_custom_call.1} parent=1 // pred_check
      _
    $region19: #{tpu_custom_call.1} parent=1 // pred_check_branch
      %122 = sbr.rel (0) target = $region21
    $region20: #{tpu_custom_call.1} parent=1 // pred_region
      %s124 = ssub.s32 256, 256
      %125 = vsyncadd [#allocation3], %s124
      %s126 = sshll.u32 [#allocation2], 4
      %s127 = int_to_ptr.vmem [resolvable:$true] %s126
      %132 = dma.vmem_to_hbm [thread:$0]  %s127, 256, %s2, [#allocation3], 128, 128, 8
    $region21: #{tpu_custom_call.1} parent=1 // pred_fallthru
      _
    // Predicated region
    $region22: #{tpu_custom_call.1} parent=1 // pred_check
      _
    $region23: #{tpu_custom_call.1} parent=1 // pred_check_branch
      %134 = sbr.rel (0) target = $region25
    $region24: #{tpu_custom_call.1} parent=1 // pred_region
      %135 = dma.done [#allocation3], 256
    $region25: #{tpu_custom_call.1} parent=1 // pred_fallthru
      _
    %136 = vsyncpa [#allocation3], 1

</llo_original>
